<compile_context>
chip_gen: v5e
topology: v5e:2x2
jax: 0.10.0
libtpu: 0.0.40
codegen_flags: <defaults>
</compile_context>

<pallas_src>
import functools

import jax
import jax.numpy as jnp
from jax import lax
from jax.experimental import pallas as pl
from jax.experimental.pallas import tpu as pltpu


def _pick_tiles(B, N, D, itemsize, target_block_bytes):
    """Choose (tb, tn, td) tiles for a (B, N, D) -> sum-over-N kernel."""
    # Sublane packing width of the dtype: f32 -> 8, bf16 -> 16, int8/fp8 -> 32.
    pack = max(8, 32 // max(1, itemsize))
    # Batch tile: second-to-last dim of the (tb, td) output block -> full B or 8.
    tb = B if B <= 8 else 8
    # Feature (lane) tile: full D unless even a minimal (tb, pack, D) block
    # exceeds the budget; then tile D in multiples of 128 (extra parallel axis).
    if tb * pack * D * itemsize <= target_block_bytes:
        td = D
    else:
        td = max(128, ((target_block_bytes // (tb * pack * itemsize)) // 128) * 128)
        td = min(td, D)
    # Agent tile: multiple of the packing width, or the full dim.
    max_rows = max(pack, target_block_bytes // max(1, tb * td * itemsize))
    if N <= max_rows:
        tn = N
    else:
        tn = max(pack, (min(max_rows, N) // pack) * pack)
    return tb, tn, td


def _agg_kernel(qs_ref, out_ref, acc_ref, *, r0, tn):
    # qs_ref : VMEM (tb, tn, td)   out_ref : VMEM (tb, td)
    # acc_ref: VMEM f32 (tb, td) scratch accumulator (persists across k axis).
    k = pl.program_id(2)

    @pl.when(k == 0)
    def _():
        acc_ref[...] = jnp.zeros_like(acc_ref)

    x = qs_ref[...].astype(jnp.float32)  # upcast -> accurate accumulation

    if r0 > 0:
        # Static head cut: only the first kernel block contains rows below the
        # n+1 boundary.  jnp.where (select) -- never multiply padded data by 0.
        @pl.when(k == 0)
        def _():
            row = lax.broadcasted_iota(jnp.int32, (1, tn, 1), 1)
            acc_ref[...] += jnp.sum(jnp.where(row >= r0, x, 0.0), axis=1)

        @pl.when(k > 0)
        def _():
            acc_ref[...] += jnp.sum(x, axis=1)
    else:
        # No head cut inside any kernel block: plain unmasked sums everywhere.
        acc_ref[...] += jnp.sum(x, axis=1)

    @pl.when(k == pl.num_programs(2) - 1)
    def _():
        out_ref[...] = acc_ref[...].astype(out_ref.dtype)


def aggregate_unclustered_sum(qs: jax.Array, n, *,
                              target_block_bytes: int = 8 << 20) -> jax.Array:
    """Q = qs[:, n+1:].sum(axis=1), computed with a tiled Pallas TPU kernel.

    `n` must be a concrete Python int (it is a slice bound, exactly like in the
    reference PyTorch module).
    """
    B, N, D = qs.shape
    n = int(n)
    start = n + 1

    if start >= N:  # empty slice -> zeros (matches torch's empty-slice sum)
        return jnp.zeros((B, D), dtype=qs.dtype)
    start = max(start, 0)

    itemsize = qs.dtype.itemsize
    tb, tn, td = _pick_tiles(B, N, D, itemsize, target_block_bytes)

    kb0 = start // tn        # first agent block the kernel touches
    k_last = N // tn         # first *partial* (ragged) agent block, if any
    num_kb = k_last - kb0    # fully in-bounds reduction steps for the kernel

    # Ragged tail rows [max(start, k_last*tn), N): fewer than tn rows, summed
    # with plain XLA so the kernel never reads past N on the reduction axis.
    tail_lo = max(start, k_last * tn)
    tail = None
    if tail_lo < N:
        tail = jnp.sum(qs[:, tail_lo:N, :].astype(jnp.float32),
                       axis=1).astype(qs.dtype)

    if num_kb == 0:
        # All valid rows live inside the ragged tail block.
        return tail

    r0 = start - kb0 * tn    # static head offset inside the first kernel block

    grid = (pl.cdiv(B, tb), pl.cdiv(D, td), num_kb)
    kernel = functools.partial(_agg_kernel, r0=r0, tn=tn)

    # VMEM budget: 2x double-buffered input block + output buffers + f32 scratch.
    block_bytes = tb * tn * td * itemsize
    aux_bytes = tb * td * (2 * itemsize + 4)
    vmem_limit = int(min(64 << 20,
                         max(16 << 20, 2 * block_bytes + aux_bytes + (2 << 20))))

    out = pl.pallas_call(
        kernel,
        out_shape=jax.ShapeDtypeStruct((B, D), qs.dtype),
        grid_spec=pltpu.PrefetchScalarGridSpec(
            num_scalar_prefetch=0,
            grid=grid,
            in_specs=[
                # Agent rows [0, kb0*tn) are never DMA'd from HBM; all fetched
                # blocks are fully in-bounds (no ragged reads on the N axis).
                pl.BlockSpec((tb, tn, td), lambda i, j, k: (i, kb0 + k, j)),
            ],
            out_specs=pl.BlockSpec((tb, td), lambda i, j, k: (i, j)),
            scratch_shapes=[pltpu.VMEM((tb, td), jnp.float32)],
        ),
        compiler_params=pltpu.CompilerParams(
            dimension_semantics=("parallel", "parallel", "arbitrary"),
            vmem_limit_bytes=vmem_limit,
        ),
    )(qs)

    if tail is not None:
        out = out + tail
    return out


if __name__ == "__main__":
    key = jax.random.PRNGKey(0)

    # Primary small case consistent with the module: batch=2, agents=8, hidden=32.
    B, N, D = 2, 8, 32
    n = 2
    qs = jax.random.normal(key, (B, N, D), dtype=jnp.float32)
    q_kernel = aggregate_unclustered_sum(qs, n)
    jax.block_until_ready(q_kernel)
    q_ref = qs[:, n + 1:].sum(axis=1)
    assert q_kernel.shape == (B, D)
    assert jnp.allclose(q_kernel, q_ref, atol=1e-5, rtol=1e-5), \
        "mismatch vs reference (small)"

    # Tiled case: head-masked first block + ragged tail handled in the wrapper.
    B2, N2, D2 = 4, 40, 128
    n2 = 21
    qs2 = jax.random.normal(jax.random.PRNGKey(1), (B2, N2, D2), dtype=jnp.float32)
    q2 = aggregate_unclustered_sum(qs2, n2, target_block_bytes=4 * 128 * 4 * 16)
    jax.block_until_ready(q2)
    q2_ref = qs2[:, n2 + 1:].sum(axis=1)
    assert jnp.allclose(q2, q2_ref, atol=1e-4, rtol=1e-4), \
        "mismatch vs reference (tiled, head+tail)"

    # Multi-step reduction: several interior blocks, no head mask, no tail.
    B3, N3, D3 = 2, 64, 128
    n3 = 15
    qs3 = jax.random.normal(jax.random.PRNGKey(2), (B3, N3, D3), dtype=jnp.float32)
    q3 = aggregate_unclustered_sum(qs3, n3, target_block_bytes=2 * 128 * 4 * 16)
    jax.block_until_ready(q3)
    q3_ref = qs3[:, n3 + 1:].sum(axis=1)
    assert jnp.allclose(q3, q3_ref, atol=1e-4, rtol=1e-4), \
        "mismatch vs reference (multi-step)"

    # bf16 case exercising the 16-row sublane packing path (loose tolerance).
    B4, N4, D4 = 2, 48, 128
    n4 = 7
    qs4 = jax.random.normal(jax.random.PRNGKey(3), (B4, N4, D4), dtype=jnp.bfloat16)
    q4 = aggregate_unclustered_sum(qs4, n4, target_block_bytes=2 * 128 * 2 * 32)
    jax.block_until_ready(q4)
    q4_ref = qs4[:, n4 + 1:].sum(axis=1)
    assert jnp.allclose(q4.astype(jnp.float32), q4_ref.astype(jnp.float32),
                        atol=0.3, rtol=0.05), "mismatch vs reference (bf16)"

    # Empty-slice edge case (n + 1 >= N) -> zeros, matching torch semantics.
    q5 = aggregate_unclustered_sum(qs, N - 1)
    assert jnp.allclose(q5, jnp.zeros((B, D), dtype=qs.dtype)), \
        "empty-slice case failed"

    print("KERNEL_OK")
</pallas_src>

<mosaic_0001>
module attributes {stable_mosaic.version = 11 : i64} {
  func.func @_agg_kernel(%arg0: i32, %arg1: i32, %arg2: i32, %arg3: memref<2x8x32xf32, #tpu.memory_space<vmem>>, %arg4: memref<2x32xf32, #tpu.memory_space<vmem>>, %arg5: memref<2x32xf32, #tpu.memory_space<vmem>>) attributes {dimension_semantics = [#tpu.dimension_semantics<parallel>, #tpu.dimension_semantics<parallel>, #tpu.dimension_semantics<arbitrary>], iteration_bounds = array<i64: 1, 1, 1>, scalar_prefetch = 0 : i64, scratch_operands = 1 : i64, tpu.core_type = #tpu.core_type<tc>, window_params = [{transform_indices = @transform_0, window_bounds = array<i64: 2, 8, 32>}, {transform_indices = @transform_1, window_bounds = array<i64: 2, 32>}]} {
    %c0_i32 = arith.constant 0 : i32
    %0 = arith.cmpi eq, %arg2, %c0_i32 : i32
    %1 = arith.extui %0 : i1 to i32
    %c0_i32_0 = arith.constant 0 : i32
    %2 = arith.cmpi ne, %1, %c0_i32_0 : i32
    scf.if %2 {
      %cst = arith.constant 0.000000e+00 : f32
      %13 = vector.broadcast %cst : f32 to vector<2x32xf32>
      %c0_9 = arith.constant 0 : index
      %c0_10 = arith.constant 0 : index
      %14 = vector.load %arg5[%c0_9, %c0_10] : memref<2x32xf32, #tpu.memory_space<vmem>>, vector<2x32xf32>
      tpu.vector_store %arg5[%c0_9, %c0_10], %13 {strides = array<i32>} : memref<2x32xf32, #tpu.memory_space<vmem>>, vector<2x32xf32>,
    } else {
    }
    %c0 = arith.constant 0 : index
    %c0_1 = arith.constant 0 : index
    %c0_2 = arith.constant 0 : index
    %3 = vector.load %arg3[%c0, %c0_1, %c0_2] : memref<2x8x32xf32, #tpu.memory_space<vmem>>, vector<2x8x32xf32>
    %c0_i32_3 = arith.constant 0 : i32
    %4 = arith.cmpi eq, %arg2, %c0_i32_3 : i32
    %5 = arith.extui %4 : i1 to i32
    %c0_i32_4 = arith.constant 0 : i32
    %6 = arith.cmpi ne, %5, %c0_i32_4 : i32
    scf.if %6 {
      %13 = tpu.iota {dimensions = array<i32: 1>} : vector<1x8x1xi32>
      %c0_9 = arith.constant 0 : index
      %c0_10 = arith.constant 0 : index
      %14 = vector.load %arg5[%c0_9, %c0_10] : memref<2x32xf32, #tpu.memory_space<vmem>>, vector<2x32xf32>
      %c3_i32 = arith.constant 3 : i32
      %15 = vector.broadcast %c3_i32 : i32 to vector<1x8x1xi32>
      %16 = arith.cmpi sge, %13, %15 : vector<1x8x1xi32>
      %cst = arith.constant 0.000000e+00 : f32
      %17 = vector.shape_cast %16 : vector<1x8x1xi1> to vector<1x8x1xi1>
      %18 = vector.broadcast %17 : vector<1x8x1xi1> to vector<2x8x32xi1>
      %19 = vector.broadcast %cst : f32 to vector<2x8x32xf32>
      %20 = arith.select %18, %3, %19 : vector<2x8x32xi1>, vector<2x8x32xf32>
      %cst_11 = arith.constant dense<0.000000e+00> : vector<2x32xf32>
      %21 = vector.multi_reduction <add>, %20, %cst_11 [1] : vector<2x8x32xf32> to vector<2x32xf32>
      %22 = arith.addf %14, %21 : vector<2x32xf32>
      %c0_12 = arith.constant 0 : index
      %c0_13 = arith.constant 0 : index
      %23 = vector.load %arg5[%c0_12, %c0_13] : memref<2x32xf32, #tpu.memory_space<vmem>>, vector<2x32xf32>
      tpu.vector_store %arg5[%c0_12, %c0_13], %22 {strides = array<i32>} : memref<2x32xf32, #tpu.memory_space<vmem>>, vector<2x32xf32>,
    } else {
    }
    %c0_i32_5 = arith.constant 0 : i32
    %7 = arith.cmpi sgt, %arg2, %c0_i32_5 : i32
    %8 = arith.extui %7 : i1 to i32
    %c0_i32_6 = arith.constant 0 : i32
    %9 = arith.cmpi ne, %8, %c0_i32_6 : i32
    scf.if %9 {
      %c0_9 = arith.constant 0 : index
      %c0_10 = arith.constant 0 : index
      %13 = vector.load %arg5[%c0_9, %c0_10] : memref<2x32xf32, #tpu.memory_space<vmem>>, vector<2x32xf32>
      %cst = arith.constant dense<0.000000e+00> : vector<2x32xf32>
      %14 = vector.multi_reduction <add>, %3, %cst [1] : vector<2x8x32xf32> to vector<2x32xf32>
      %15 = arith.addf %13, %14 : vector<2x32xf32>
      %c0_11 = arith.constant 0 : index
      %c0_12 = arith.constant 0 : index
      %16 = vector.load %arg5[%c0_11, %c0_12] : memref<2x32xf32, #tpu.memory_space<vmem>>, vector<2x32xf32>
      tpu.vector_store %arg5[%c0_11, %c0_12], %15 {strides = array<i32>} : memref<2x32xf32, #tpu.memory_space<vmem>>, vector<2x32xf32>,
    } else {
    }
    %c0_i32_7 = arith.constant 0 : i32
    %10 = arith.cmpi eq, %arg2, %c0_i32_7 : i32
    %11 = arith.extui %10 : i1 to i32
    %c0_i32_8 = arith.constant 0 : i32
    %12 = arith.cmpi ne, %11, %c0_i32_8 : i32
    scf.if %12 {
      %c0_9 = arith.constant 0 : index
      %c0_10 = arith.constant 0 : index
      %13 = vector.load %arg5[%c0_9, %c0_10] : memref<2x32xf32, #tpu.memory_space<vmem>>, vector<2x32xf32>
      %c0_11 = arith.constant 0 : index
      %c0_12 = arith.constant 0 : index
      %14 = vector.load %arg4[%c0_11, %c0_12] : memref<2x32xf32, #tpu.memory_space<vmem>>, vector<2x32xf32>
      tpu.vector_store %arg4[%c0_11, %c0_12], %13 {strides = array<i32>} : memref<2x32xf32, #tpu.memory_space<vmem>>, vector<2x32xf32>,
    } else {
    }
    return
  }
  func.func @transform_0(%arg0: i32, %arg1: i32, %arg2: i32) -> (i32, i32, i32) {
    %c0_i32 = arith.constant 0 : i32
    %0 = arith.addi %c0_i32, %arg2 : i32
    %c0_i32_0 = arith.constant 0 : i32
    return %arg0, %0, %arg1 : i32, i32, i32
  }
  func.func @transform_1(%arg0: i32, %arg1: i32, %arg2: i32) -> (i32, i32) {
    %c0_i32 = arith.constant 0 : i32
    return %arg0, %arg1 : i32, i32
  }
}

</mosaic_0001>

<llo_original>
// kernel: tpu_custom_call.1
$region0: #{tpu_custom_call.1}
  #allocation0 [shape = 'u32[]', space=smem, size = 0x4, offset = 0x4, fixed_abs, tag = 'smem constant byte address 0x4 - core index']
  #allocation1 [shape = 'u32[72,128]{1,0:T(1,128)}', space=vmem, size = 0x9000, scoped, tag = 'internal scratch']
  #allocation2 [shape = 'f32[2,32]{1,0:T(2,128)}', space=vmem, size = 0x400, scoped, tag = 'scratch operand']
  %s0 = inlined_call_operand.hbm [shape: f32[2,8,32], index: 0, kind: input, shape index: {}]
  %s1 = inlined_call_operand.hbm [shape: f32[2,32], index: 1, kind: output, shape index: {}]
  %s2 = sld [smem:[#allocation0]]
  $region34: #{tpu_custom_call.1} parent=0
    _
  %s4 = ssub.s32 1, %s2
  %s5 = scalar_select 0, %s4, %s2
  $region1: #{tpu_custom_call.1} parent=0
    #allocation3 [shape = 'u8[8192]{0}', space=vmem, size = 0x2000, scoped, tag = 'input window, operand 0, single buffered']
    #allocation4 [shape = 's32[1]{0}', space=sflag, size = 0x4, scoped, tag = 'scoped memory for tpu_custom_call.1']
    #allocation5 [shape = 's32[1]{0}', space=sflag, size = 0x4, scoped, tag = 'scoped memory for tpu_custom_call.1']
    #allocation6 [shape = 'u8[1024]{0}', space=vmem, size = 0x400, scoped, tag = 'output window, operand 0, single buffered']
    %6 = vsyncpa [#allocation4], 0
    %7 = vsyncpa [#allocation5], 0
    // Predicated region
    $region2: #{tpu_custom_call.1} parent=1 // pred_check
      _
    $region3: #{tpu_custom_call.1} parent=1 // pred_check_branch
      %9 = sbr.rel (0) target = $region5
    $region4: #{tpu_custom_call.1} parent=1 // pred_region
      %11 = vsyncadd [#allocation4], 0
      %s12 = sshll.u32 %s0, 4
      %s13 = int_to_ptr.hbm [resolvable:$true] %s12
      %s14 = sshll.u32 [#allocation3], 4
      %s15 = int_to_ptr.vmem [resolvable:$true] %s14
      %20 = dma.hbm_to_vmem [thread:$0]  %s13, 256, %s15, [#allocation4], 128, 128, 8
    $region5: #{tpu_custom_call.1} parent=1 // pred_fallthru
      _
    // Predicated region
    $region6: #{tpu_custom_call.1} parent=1 // pred_check
      _
    $region7: #{tpu_custom_call.1} parent=1 // pred_check_branch
      %22 = sbr.rel (0) target = $region9
    $region8: #{tpu_custom_call.1} parent=1 // pred_region
      %24 = dma.done [#allocation4], 256
    $region9: #{tpu_custom_call.1} parent=1 // pred_fallthru
      _
    %p25 = scmp.eq.s32.totalorder 0, 0
    // Predicated region
    $region10: #{tpu_custom_call.1} parent=1 // pred_check
      %p26 = pneg %p25
    $region11: #{tpu_custom_call.1} parent=1 // pred_check_branch
      %28 = sbr.rel (%p26) target = $region13
    $region12: #{tpu_custom_call.1} parent=1 // pred_region
      %vm29 = vcmask 254976
      %30 = vst.msk [vmem:[#allocation2] sm:$0x3] %vm29, 0.0
    $region13: #{tpu_custom_call.1} parent=1 // pred_fallthru
      _
    %v31 = vld [vmem:[#allocation3] sm:$0xff]
    %v32 = vld [vmem:[#allocation3 + $0x8] sm:$0xff]
    // Predicated region
    $region14: #{tpu_custom_call.1} parent=1 // pred_check
      %p33 = pneg %p25
    $region15: #{tpu_custom_call.1} parent=1 // pred_check_branch
      %35 = sbr.rel (%p33) target = $region17
    $region16: #{tpu_custom_call.1} parent=1 // pred_region
      %v36 = vlaneseq
      %v37 = vshrl.u32 %v36, 7
      %v38 = vld [vmem:[#allocation2] sm:$0x3]
      %vm39 = vcmp.ge.s32.totalorder %v37, 3
      %v40 = vsel %vm39, 1, 0
      %vm41 = vcmp.eq.s32.totalorder %v40, 1
      %v42 = vsel %vm41, %v31, 0.0
      %v43 = vsel %vm41, %v32, 0.0
      %vm44 = vcmask 261120
      %v45 = vsel %vm44, %v42, 0.0
      %v46 = vrot.slane %v45, 4
      %v47 = vadd.f32 %v45, %v46
      %v48 = vrot.slane %v47, 2
      %v49 = vadd.f32 %v47, %v48
      %v50 = vrot.slane %v49, 1
      %v51 = vadd.f32 %v49, %v50
      %v52 = vsel %vm44, %v43, 0.0
      %v53 = vrot.slane %v52, 4
      %v54 = vadd.f32 %v52, %v53
      %v55 = vrot.slane %v54, 2
      %v56 = vadd.f32 %v54, %v55
      %v57 = vrot.slane %v56, 1
      %v58 = vadd.f32 %v56, %v57
      %vm61 = vcmask 1041409
      %v62 = vsel %vm61, %v58, %v51
      %v64 = vadd.f32 %v38, %v62
      %vm65 = vcmask 254976
      %66 = vst.msk [vmem:[#allocation2] sm:$0x3] %vm65, %v64
    $region17: #{tpu_custom_call.1} parent=1 // pred_fallthru
      _
    %p67 = scmp.gt.s32.totalorder 0, 0
    // Predicated region
    $region18: #{tpu_custom_call.1} parent=1 // pred_check
      %p68 = pneg %p67
    $region19: #{tpu_custom_call.1} parent=1 // pred_check_branch
      %70 = sbr.rel (%p68) target = $region21
    $region20: #{tpu_custom_call.1} parent=1 // pred_region
      %v71 = vld [vmem:[#allocation2] sm:$0x3]
      %vm72 = vcmask 261120
      %v73 = vsel %vm72, %v31, 0.0
      %v74 = vrot.slane %v73, 4
      %v75 = vadd.f32 %v73, %v74
      %v76 = vrot.slane %v75, 2
      %v77 = vadd.f32 %v75, %v76
      %v78 = vrot.slane %v77, 1
      %v79 = vadd.f32 %v77, %v78
      %v80 = vsel %vm72, %v32, 0.0
      %v81 = vrot.slane %v80, 4
      %v82 = vadd.f32 %v80, %v81
      %v83 = vrot.slane %v82, 2
      %v84 = vadd.f32 %v82, %v83
      %v85 = vrot.slane %v84, 1
      %v86 = vadd.f32 %v84, %v85
      %vm89 = vcmask 1041409
      %v90 = vsel %vm89, %v86, %v79
      %v92 = vadd.f32 %v71, %v90
      %vm93 = vcmask 254976
      %94 = vst.msk [vmem:[#allocation2] sm:$0x3] %vm93, %v92
    $region21: #{tpu_custom_call.1} parent=1 // pred_fallthru
      _
    // Predicated region
    $region22: #{tpu_custom_call.1} parent=1 // pred_check
      %p95 = pneg %p25
    $region23: #{tpu_custom_call.1} parent=1 // pred_check_branch
      %97 = sbr.rel (%p95) target = $region25
    $region24: #{tpu_custom_call.1} parent=1 // pred_region
      %v98 = vld [vmem:[#allocation2] sm:$0x3]
      %vm99 = vcmask 254976
      %100 = vst.msk [vmem:[#allocation6] sm:$0x3] %vm99, %v98
    $region25: #{tpu_custom_call.1} parent=1 // pred_fallthru
      _
    // Predicated region
    $region26: #{tpu_custom_call.1} parent=1 // pred_check
      _
    $region27: #{tpu_custom_call.1} parent=1 // pred_check_branch
      %102 = sbr.rel (0) target = $region29
    $region28: #{tpu_custom_call.1} parent=1 // pred_region
      %104 = vsyncadd [#allocation5], 0
      %s106 = sshll.u32 [#allocation6], 4
      %s107 = int_to_ptr.vmem [resolvable:$true] %s106
      %s108 = sshll.u32 %s1, 4
      %s109 = int_to_ptr.hbm [resolvable:$true] %s108
      %111 = dma.vmem_to_hbm [thread:$0]  %s107, 32, %s109, [#allocation5]
    $region29: #{tpu_custom_call.1} parent=1 // pred_fallthru
      _
    // Predicated region
    $region30: #{tpu_custom_call.1} parent=1 // pred_check
      _
    $region31: #{tpu_custom_call.1} parent=1 // pred_check_branch
      %113 = sbr.rel (0) target = $region33
    $region32: #{tpu_custom_call.1} parent=1 // pred_region
      %115 = dma.done [#allocation5], 32
    $region33: #{tpu_custom_call.1} parent=1 // pred_fallthru
      _
    %116 = vsyncpa [#allocation4], 1
    %117 = vsyncpa [#allocation5], 1

</llo_original>
